<compile_context>
chip_gen: v7x
topology: tpu7x:2x2x1
jax: 0.10.0
libtpu: 0.0.40
codegen_flags: <defaults>
</compile_context>

<pallas_src>
import functools
import math

import jax
import jax.numpy as jnp
from jax.experimental import pallas as pl
from jax.experimental.pallas import tpu as pltpu


def _round_up(n, m):
    return ((n + m - 1) // m) * m


def _vmem_params():
    """(tile_budget_bytes, vmem_limit_bytes), scaled to this generation's VMEM.

    The tile budget covers the double-buffered input+output blocks; the
    explicit scoped-VMEM limit leaves ~16 MiB of headroom above it.
    v7x (64 MiB/TC): 16 MiB tiles / 32 MiB limit.  v5e/v6e (128 MiB):
    32 MiB tiles / 48 MiB limit.
    """
    try:
        cap = int(pltpu.get_tpu_info().vmem_capacity_bytes)
    except Exception:
        cap = 64 * 1024 * 1024  # conservative default (v7x per-core size)
    cap = max(cap, 32 * 1024 * 1024)
    tile_budget = cap // 4
    vmem_limit = min(cap // 2, tile_budget + (16 << 20))
    return tile_budget, vmem_limit


def _pick_row_tile(rows, in_lane, out_lane, itemsize, budget_bytes):
    """Row tile (second-minor dim) for the VMEM-pipelined copy path.

    Uses the *real* VMEM footprint of the double-buffered blocks: lane dims
    padded to multiples of 128, row dims padded to the dtype's sublane tile
    (8 for 4-byte, 16 for 2-byte, 32 for 1-byte dtypes).  Returns None when
    even a single sublane tile of rows cannot fit the budget.
    """
    sub = max(8, 32 // itemsize)
    per_row = 2 * (2 * _round_up(in_lane, 128)
                   + _round_up(out_lane, 128)) * itemsize  # x2 = double buffer
    max_tr = ((budget_bytes // per_row) // sub) * sub
    if max_tr < sub:
        return None
    if rows < 2 * sub:
        return rows  # single full-extent block (always layout-legal)
    # At least 2 grid steps (dual-TensorCore parts can split the stream) and
    # ~4 for big copies (read/write overlap of a zero-compute stream), but the
    # VMEM budget stays the cap: big tiles are the throughput lever, per-step
    # overhead (~0.35 us) the enemy.
    target = _round_up(pl.cdiv(rows, 4), sub)
    return max(sub, min(max_tr, target))


def _concat_kernel(x_ref, o_ref, *, w, k):
    """x_ref: (2, TR, k*W) in VMEM;  o_ref: (TR, 2*k*W) in VMEM.

    Interleaves the k W-wide chunks of x[0]/x[1] into a lane-dense output
    slab.  For k == 1 this degenerates to the two whole-slab stores
    (o[:, :W] = x[0], o[:, W:] = x[1]) -- no concatenate temporary.  For k > 1
    the 2k sub-slice copies are masked VMEM stores; that VPU-side assembly
    stays hidden under the dense HBM DMA stream, which is the real bottleneck
    of this zero-compute copy.
    """
    for j in range(k):
        a = x_ref[0, :, j * w:(j + 1) * w]
        b = x_ref[1, :, j * w:(j + 1) * w]
        o_ref[:, 2 * j * w:(2 * j + 1) * w] = a
        o_ref[:, (2 * j + 1) * w:(2 * j + 2) * w] = b


def _dma_concat_kernel(x_ref, o_ref, sem):
    """x_ref: (B, R, W) in HBM;  o_ref: (R, 2*W) in HBM;  W % 128 == 0.

    Pure-DMA path: two strided HBM->HBM copies place x[0] into out[:, :W] and
    x[1] into out[:, W:].  No VMEM staging, no vld/vst TensorCore work, no
    grid-step overhead -- the copy runs at DMA-engine / HBM bandwidth.  Only
    batch slices 0 and 1 are read, whatever B is.
    """
    w = o_ref.shape[-1] // 2
    cp0 = pltpu.make_async_copy(x_ref.at[0], o_ref.at[:, 0:w], sem.at[0])
    cp1 = pltpu.make_async_copy(x_ref.at[1], o_ref.at[:, w:2 * w], sem.at[1])
    cp0.start()
    cp1.start()
    cp0.wait()
    cp1.wait()


def single_concat(x):
    """x: (B >= 2, C, H, W) -> (1, C, H, 2*W), same dtype."""
    b, c, h, w = x.shape
    assert b >= 2, "singleConcat needs at least 2 items along dim 0"
    rows = c * h
    itemsize = jnp.dtype(x.dtype).itemsize
    tile_budget, vmem_limit = _vmem_params()

    # ---- Fast path: 128-aligned W -> direct HBM->HBM DMA, no VMEM ----------
    if w % 128 == 0 and rows % 8 == 0:
        x3 = x.reshape(b, rows, w)  # layout-compatible (free) view
        out2d = pl.pallas_call(
            _dma_concat_kernel,
            out_shape=jax.ShapeDtypeStruct((rows, 2 * w), x.dtype),
            in_specs=[pl.BlockSpec(memory_space=pl.ANY)],
            out_specs=pl.BlockSpec(memory_space=pl.ANY),
            scratch_shapes=[pltpu.SemaphoreType.DMA((2,))],
        )(x3)
        return out2d.reshape(1, c, h, 2 * w)

    # ---- Lane density: group k rows per "super-row" when W < 128 -----------
    # k*W becomes a multiple of 128 and 2*k*W a multiple of 256, so both the
    # input and output DMA blocks are lane-dense (unmasked stores, >=512 B
    # contiguous HBM rows).  Pure wrapper-side layout plumbing.
    k = 1
    if w < 128:
        k_min = 128 // math.gcd(w, 128)
        if rows % k_min == 0:
            k = k_min
    rows_k = rows // k
    in_lane, out_lane = k * w, 2 * k * w

    tr = _pick_row_tile(rows_k, in_lane, out_lane, itemsize, tile_budget)
    if tr is None:
        # TODO(synk): W this wide (and not 128-aligned) needs a lane-tiled
        # second grid axis; fall back to XLA concatenate for that corner case.
        return jnp.concatenate([x[0][None], x[1][None]], axis=-1)

    x_sr = x.reshape(b, rows_k, in_lane)
    grid = (pl.cdiv(rows_k, tr),)
    out2d = pl.pallas_call(
        functools.partial(_concat_kernel, w=w, k=k),
        out_shape=jax.ShapeDtypeStruct((rows_k, out_lane), x.dtype),
        grid=grid,
        # Leading block dim of 2 => only x[0] and x[1] are ever DMA'd.
        in_specs=[pl.BlockSpec((2, tr, in_lane), lambda i: (0, i, 0))],
        out_specs=pl.BlockSpec((tr, out_lane), lambda i: (i, 0)),
        compiler_params=pltpu.CompilerParams(
            # "parallel" lets megacore parts shard the row axis (CORE_PARALLEL
            # is the v7x-specific option; kept portable across v5e/v6e here).
            dimension_semantics=("parallel",),
            vmem_limit_bytes=vmem_limit,
        ),
        # Default double-buffering only -- extra pipeline depth would just
        # shrink the affordable tile size for this streaming copy.
    )(x_sr)
    return out2d.reshape(1, c, h, 2 * w)


if __name__ == "__main__":
    key = jax.random.PRNGKey(0)
    key1, key2, key3 = jax.random.split(key, 3)

    def ref_fn(inp):
        return jnp.concatenate([inp[0][None], inp[1][None]], axis=-1)

    # Spec shape: W = 16 -> lane-dense super-row path (k = 8), single step.
    x = jax.random.normal(key1, (2, 4, 16, 16), dtype=jnp.float32)
    out = jax.block_until_ready(single_concat(x))
    assert out.shape == (1, 4, 16, 32), out.shape
    assert out.dtype == x.dtype
    assert jnp.array_equal(out, ref_fn(x))

    # General k = 1 path (W >= 128, not 128-aligned), full-extent block.
    x2 = jax.random.normal(key2, (2, 3, 5, 160), dtype=jnp.float32)
    out2 = jax.block_until_ready(single_concat(x2))
    assert out2.shape == (1, 3, 5, 320), out2.shape
    assert jnp.array_equal(out2, ref_fn(x2))

    # Super-row path with a multi-step pipelined grid (grid > 1).
    x3 = jax.random.normal(key3, (2, 16, 16, 16), dtype=jnp.float32)
    out3 = jax.block_until_ready(single_concat(x3))
    assert out3.shape == (1, 16, 16, 32), out3.shape
    assert jnp.array_equal(out3, ref_fn(x3))

    print("KERNEL_OK")
</pallas_src>

<mosaic_0001>
module attributes {stable_mosaic.version = 11 : i64} {
  func.func @_concat_kernel(%arg0: i32, %arg1: memref<2x8x128xf32, #tpu.memory_space<vmem>>, %arg2: memref<8x256xf32, #tpu.memory_space<vmem>>) attributes {dimension_semantics = [#tpu.dimension_semantics<parallel>], iteration_bounds = array<i64: 1>, scalar_prefetch = 0 : i64, scratch_operands = 0 : i64, tpu.core_type = #tpu.core_type<tc>, window_params = [{transform_indices = @transform_0, window_bounds = array<i64: 2, 8, 128>}, {transform_indices = @transform_1, window_bounds = array<i64: 8, 256>}]} {
    %c0 = arith.constant 0 : index
    %c0_0 = arith.constant 0 : index
    %c0_1 = arith.constant 0 : index
    %0 = vector.load %arg1[%c0, %c0_0, %c0_1] : memref<2x8x128xf32, #tpu.memory_space<vmem>>, vector<1x8x16xf32>
    %1 = vector.shape_cast %0 : vector<1x8x16xf32> to vector<8x16xf32>
    %c1 = arith.constant 1 : index
    %c0_2 = arith.constant 0 : index
    %c0_3 = arith.constant 0 : index
    %2 = vector.load %arg1[%c1, %c0_2, %c0_3] : memref<2x8x128xf32, #tpu.memory_space<vmem>>, vector<1x8x16xf32>
    %3 = vector.shape_cast %2 : vector<1x8x16xf32> to vector<8x16xf32>
    %c0_4 = arith.constant 0 : index
    %c0_5 = arith.constant 0 : index
    %4 = vector.load %arg2[%c0_4, %c0_5] : memref<8x256xf32, #tpu.memory_space<vmem>>, vector<8x16xf32>
    tpu.vector_store %arg2[%c0_4, %c0_5], %1 {strides = array<i32>} : memref<8x256xf32, #tpu.memory_space<vmem>>, vector<8x16xf32>,
    %c0_6 = arith.constant 0 : index
    %c16 = arith.constant 16 : index
    %5 = vector.load %arg2[%c0_6, %c16] : memref<8x256xf32, #tpu.memory_space<vmem>>, vector<8x16xf32>
    tpu.vector_store %arg2[%c0_6, %c16], %3 {strides = array<i32>} : memref<8x256xf32, #tpu.memory_space<vmem>>, vector<8x16xf32>,
    %c0_7 = arith.constant 0 : index
    %c0_8 = arith.constant 0 : index
    %c16_9 = arith.constant 16 : index
    %6 = vector.load %arg1[%c0_7, %c0_8, %c16_9] : memref<2x8x128xf32, #tpu.memory_space<vmem>>, vector<1x8x16xf32>
    %7 = vector.shape_cast %6 : vector<1x8x16xf32> to vector<8x16xf32>
    %c1_10 = arith.constant 1 : index
    %c0_11 = arith.constant 0 : index
    %c16_12 = arith.constant 16 : index
    %8 = vector.load %arg1[%c1_10, %c0_11, %c16_12] : memref<2x8x128xf32, #tpu.memory_space<vmem>>, vector<1x8x16xf32>
    %9 = vector.shape_cast %8 : vector<1x8x16xf32> to vector<8x16xf32>
    %c0_13 = arith.constant 0 : index
    %c32 = arith.constant 32 : index
    %10 = vector.load %arg2[%c0_13, %c32] : memref<8x256xf32, #tpu.memory_space<vmem>>, vector<8x16xf32>
    tpu.vector_store %arg2[%c0_13, %c32], %7 {strides = array<i32>} : memref<8x256xf32, #tpu.memory_space<vmem>>, vector<8x16xf32>,
    %c0_14 = arith.constant 0 : index
    %c48 = arith.constant 48 : index
    %11 = vector.load %arg2[%c0_14, %c48] : memref<8x256xf32, #tpu.memory_space<vmem>>, vector<8x16xf32>
    tpu.vector_store %arg2[%c0_14, %c48], %9 {strides = array<i32>} : memref<8x256xf32, #tpu.memory_space<vmem>>, vector<8x16xf32>,
    %c0_15 = arith.constant 0 : index
    %c0_16 = arith.constant 0 : index
    %c32_17 = arith.constant 32 : index
    %12 = vector.load %arg1[%c0_15, %c0_16, %c32_17] : memref<2x8x128xf32, #tpu.memory_space<vmem>>, vector<1x8x16xf32>
    %13 = vector.shape_cast %12 : vector<1x8x16xf32> to vector<8x16xf32>
    %c1_18 = arith.constant 1 : index
    %c0_19 = arith.constant 0 : index
    %c32_20 = arith.constant 32 : index
    %14 = vector.load %arg1[%c1_18, %c0_19, %c32_20] : memref<2x8x128xf32, #tpu.memory_space<vmem>>, vector<1x8x16xf32>
    %15 = vector.shape_cast %14 : vector<1x8x16xf32> to vector<8x16xf32>
    %c0_21 = arith.constant 0 : index
    %c64 = arith.constant 64 : index
    %16 = vector.load %arg2[%c0_21, %c64] : memref<8x256xf32, #tpu.memory_space<vmem>>, vector<8x16xf32>
    tpu.vector_store %arg2[%c0_21, %c64], %13 {strides = array<i32>} : memref<8x256xf32, #tpu.memory_space<vmem>>, vector<8x16xf32>,
    %c0_22 = arith.constant 0 : index
    %c80 = arith.constant 80 : index
    %17 = vector.load %arg2[%c0_22, %c80] : memref<8x256xf32, #tpu.memory_space<vmem>>, vector<8x16xf32>
    tpu.vector_store %arg2[%c0_22, %c80], %15 {strides = array<i32>} : memref<8x256xf32, #tpu.memory_space<vmem>>, vector<8x16xf32>,
    %c0_23 = arith.constant 0 : index
    %c0_24 = arith.constant 0 : index
    %c48_25 = arith.constant 48 : index
    %18 = vector.load %arg1[%c0_23, %c0_24, %c48_25] : memref<2x8x128xf32, #tpu.memory_space<vmem>>, vector<1x8x16xf32>
    %19 = vector.shape_cast %18 : vector<1x8x16xf32> to vector<8x16xf32>
    %c1_26 = arith.constant 1 : index
    %c0_27 = arith.constant 0 : index
    %c48_28 = arith.constant 48 : index
    %20 = vector.load %arg1[%c1_26, %c0_27, %c48_28] : memref<2x8x128xf32, #tpu.memory_space<vmem>>, vector<1x8x16xf32>
    %21 = vector.shape_cast %20 : vector<1x8x16xf32> to vector<8x16xf32>
    %c0_29 = arith.constant 0 : index
    %c96 = arith.constant 96 : index
    %22 = vector.load %arg2[%c0_29, %c96] : memref<8x256xf32, #tpu.memory_space<vmem>>, vector<8x16xf32>
    tpu.vector_store %arg2[%c0_29, %c96], %19 {strides = array<i32>} : memref<8x256xf32, #tpu.memory_space<vmem>>, vector<8x16xf32>,
    %c0_30 = arith.constant 0 : index
    %c112 = arith.constant 112 : index
    %23 = vector.load %arg2[%c0_30, %c112] : memref<8x256xf32, #tpu.memory_space<vmem>>, vector<8x16xf32>
    tpu.vector_store %arg2[%c0_30, %c112], %21 {strides = array<i32>} : memref<8x256xf32, #tpu.memory_space<vmem>>, vector<8x16xf32>,
    %c0_31 = arith.constant 0 : index
    %c0_32 = arith.constant 0 : index
    %c64_33 = arith.constant 64 : index
    %24 = vector.load %arg1[%c0_31, %c0_32, %c64_33] : memref<2x8x128xf32, #tpu.memory_space<vmem>>, vector<1x8x16xf32>
    %25 = vector.shape_cast %24 : vector<1x8x16xf32> to vector<8x16xf32>
    %c1_34 = arith.constant 1 : index
    %c0_35 = arith.constant 0 : index
    %c64_36 = arith.constant 64 : index
    %26 = vector.load %arg1[%c1_34, %c0_35, %c64_36] : memref<2x8x128xf32, #tpu.memory_space<vmem>>, vector<1x8x16xf32>
    %27 = vector.shape_cast %26 : vector<1x8x16xf32> to vector<8x16xf32>
    %c0_37 = arith.constant 0 : index
    %c128 = arith.constant 128 : index
    %28 = vector.load %arg2[%c0_37, %c128] : memref<8x256xf32, #tpu.memory_space<vmem>>, vector<8x16xf32>
    tpu.vector_store %arg2[%c0_37, %c128], %25 {strides = array<i32>} : memref<8x256xf32, #tpu.memory_space<vmem>>, vector<8x16xf32>,
    %c0_38 = arith.constant 0 : index
    %c144 = arith.constant 144 : index
    %29 = vector.load %arg2[%c0_38, %c144] : memref<8x256xf32, #tpu.memory_space<vmem>>, vector<8x16xf32>
    tpu.vector_store %arg2[%c0_38, %c144], %27 {strides = array<i32>} : memref<8x256xf32, #tpu.memory_space<vmem>>, vector<8x16xf32>,
    %c0_39 = arith.constant 0 : index
    %c0_40 = arith.constant 0 : index
    %c80_41 = arith.constant 80 : index
    %30 = vector.load %arg1[%c0_39, %c0_40, %c80_41] : memref<2x8x128xf32, #tpu.memory_space<vmem>>, vector<1x8x16xf32>
    %31 = vector.shape_cast %30 : vector<1x8x16xf32> to vector<8x16xf32>
    %c1_42 = arith.constant 1 : index
    %c0_43 = arith.constant 0 : index
    %c80_44 = arith.constant 80 : index
    %32 = vector.load %arg1[%c1_42, %c0_43, %c80_44] : memref<2x8x128xf32, #tpu.memory_space<vmem>>, vector<1x8x16xf32>
    %33 = vector.shape_cast %32 : vector<1x8x16xf32> to vector<8x16xf32>
    %c0_45 = arith.constant 0 : index
    %c160 = arith.constant 160 : index
    %34 = vector.load %arg2[%c0_45, %c160] : memref<8x256xf32, #tpu.memory_space<vmem>>, vector<8x16xf32>
    tpu.vector_store %arg2[%c0_45, %c160], %31 {strides = array<i32>} : memref<8x256xf32, #tpu.memory_space<vmem>>, vector<8x16xf32>,
    %c0_46 = arith.constant 0 : index
    %c176 = arith.constant 176 : index
    %35 = vector.load %arg2[%c0_46, %c176] : memref<8x256xf32, #tpu.memory_space<vmem>>, vector<8x16xf32>
    tpu.vector_store %arg2[%c0_46, %c176], %33 {strides = array<i32>} : memref<8x256xf32, #tpu.memory_space<vmem>>, vector<8x16xf32>,
    %c0_47 = arith.constant 0 : index
    %c0_48 = arith.constant 0 : index
    %c96_49 = arith.constant 96 : index
    %36 = vector.load %arg1[%c0_47, %c0_48, %c96_49] : memref<2x8x128xf32, #tpu.memory_space<vmem>>, vector<1x8x16xf32>
    %37 = vector.shape_cast %36 : vector<1x8x16xf32> to vector<8x16xf32>
    %c1_50 = arith.constant 1 : index
    %c0_51 = arith.constant 0 : index
    %c96_52 = arith.constant 96 : index
    %38 = vector.load %arg1[%c1_50, %c0_51, %c96_52] : memref<2x8x128xf32, #tpu.memory_space<vmem>>, vector<1x8x16xf32>
    %39 = vector.shape_cast %38 : vector<1x8x16xf32> to vector<8x16xf32>
    %c0_53 = arith.constant 0 : index
    %c192 = arith.constant 192 : index
    %40 = vector.load %arg2[%c0_53, %c192] : memref<8x256xf32, #tpu.memory_space<vmem>>, vector<8x16xf32>
    tpu.vector_store %arg2[%c0_53, %c192], %37 {strides = array<i32>} : memref<8x256xf32, #tpu.memory_space<vmem>>, vector<8x16xf32>,
    %c0_54 = arith.constant 0 : index
    %c208 = arith.constant 208 : index
    %41 = vector.load %arg2[%c0_54, %c208] : memref<8x256xf32, #tpu.memory_space<vmem>>, vector<8x16xf32>
    tpu.vector_store %arg2[%c0_54, %c208], %39 {strides = array<i32>} : memref<8x256xf32, #tpu.memory_space<vmem>>, vector<8x16xf32>,
    %c0_55 = arith.constant 0 : index
    %c0_56 = arith.constant 0 : index
    %c112_57 = arith.constant 112 : index
    %42 = vector.load %arg1[%c0_55, %c0_56, %c112_57] : memref<2x8x128xf32, #tpu.memory_space<vmem>>, vector<1x8x16xf32>
    %43 = vector.shape_cast %42 : vector<1x8x16xf32> to vector<8x16xf32>
    %c1_58 = arith.constant 1 : index
    %c0_59 = arith.constant 0 : index
    %c112_60 = arith.constant 112 : index
    %44 = vector.load %arg1[%c1_58, %c0_59, %c112_60] : memref<2x8x128xf32, #tpu.memory_space<vmem>>, vector<1x8x16xf32>
    %45 = vector.shape_cast %44 : vector<1x8x16xf32> to vector<8x16xf32>
    %c0_61 = arith.constant 0 : index
    %c224 = arith.constant 224 : index
    %46 = vector.load %arg2[%c0_61, %c224] : memref<8x256xf32, #tpu.memory_space<vmem>>, vector<8x16xf32>
    tpu.vector_store %arg2[%c0_61, %c224], %43 {strides = array<i32>} : memref<8x256xf32, #tpu.memory_space<vmem>>, vector<8x16xf32>,
    %c0_62 = arith.constant 0 : index
    %c240 = arith.constant 240 : index
    %47 = vector.load %arg2[%c0_62, %c240] : memref<8x256xf32, #tpu.memory_space<vmem>>, vector<8x16xf32>
    tpu.vector_store %arg2[%c0_62, %c240], %45 {strides = array<i32>} : memref<8x256xf32, #tpu.memory_space<vmem>>, vector<8x16xf32>,
    return
  }
  func.func @transform_0(%arg0: i32) -> (i32, i32, i32) {
    %c0_i32 = arith.constant 0 : i32
    %c0_i32_0 = arith.constant 0 : i32
    %c0_i32_1 = arith.constant 0 : i32
    return %c0_i32, %arg0, %c0_i32_0 : i32, i32, i32
  }
  func.func @transform_1(%arg0: i32) -> (i32, i32) {
    %c0_i32 = arith.constant 0 : i32
    %c0_i32_0 = arith.constant 0 : i32
    return %arg0, %c0_i32 : i32, i32
  }
}

</mosaic_0001>

<llo_original>
// kernel: tpu_custom_call.1
$region0: #{tpu_custom_call.1}
  #allocation0 [shape = 'u32[]', space=smem, size = 0x4, offset = 0x4, fixed_abs, tag = 'smem constant byte address 0x4 - core index']
  #allocation1 [shape = 'u32[144,128]{1,0:T(1,128)}', space=vmem, size = 0x12000, scoped, tag = 'internal scratch']
  %s0 = inlined_call_operand.hbm [shape: f32[2,8,128], index: 0, kind: input, shape index: {}]
  %s1 = inlined_call_operand.hbm [shape: f32[8,256], index: 1, kind: output, shape index: {}]
  %s2 = sld [smem:[#allocation0]]
  $region18: #{tpu_custom_call.1} parent=0
    _
  %s4 = ssub.s32 1, %s2
  %s5 = scalar_select 0, %s4, %s2
  $region1: #{tpu_custom_call.1} parent=0
    #allocation2 [shape = 'u8[8192]{0}', space=vmem, size = 0x2000, scoped, tag = 'input window, operand 0, single buffered']
    #allocation3 [shape = 's32[1]{0}', space=sflag, size = 0x4, scoped, tag = 'scoped memory for tpu_custom_call.1']
    #allocation4 [shape = 's32[1]{0}', space=sflag, size = 0x4, scoped, tag = 'scoped memory for tpu_custom_call.1']
    #allocation5 [shape = 'u8[8192]{0}', space=vmem, size = 0x2000, scoped, tag = 'output window, operand 0, single buffered']
    %6 = vsyncpa [#allocation3], 0
    %7 = vsyncpa [#allocation4], 0
    // Predicated region
    $region2: #{tpu_custom_call.1} parent=1 // pred_check
      _
    $region3: #{tpu_custom_call.1} parent=1 // pred_check_branch
      %9 = sbr.rel (0) target = $region5
    $region4: #{tpu_custom_call.1} parent=1 // pred_region
      %s11 = ssub.s32 256, 256
      %12 = vsyncadd [#allocation3], %s11
      %s13 = sshll.u32 [#allocation2], 4
      %s14 = int_to_ptr.vmem [resolvable:$true] %s13
      %19 = dma.hbm_to_vmem [thread:$0]  %s0, 256, %s14, [#allocation3], 128, 128, 8
    $region5: #{tpu_custom_call.1} parent=1 // pred_fallthru
      _
    // Predicated region
    $region6: #{tpu_custom_call.1} parent=1 // pred_check
      _
    $region7: #{tpu_custom_call.1} parent=1 // pred_check_branch
      %21 = sbr.rel (0) target = $region9
    $region8: #{tpu_custom_call.1} parent=1 // pred_region
      %22 = dma.done [#allocation3], 256
    $region9: #{tpu_custom_call.1} parent=1 // pred_fallthru
      _
    %v23 = vld [vmem:[#allocation2] sm:$0xff]
    %s24 = scalar_lea.vmem [#allocation2], 8
    %v25 = vld [vmem:[%s24] sm:$0xff]
    %vm26 = vcmask 130048
    %27 = vst.msk [vmem:[#allocation5] sm:$0xff] %vm26, %v23
    %29 = vrot.lane.b32.xlu0 %v25, 16
    %v30 = vpop.permute.xlu0 %29
    %vm32 = vcmask 261248
    %33 = vst.msk [vmem:[#allocation5] sm:$0xff] %vm32, %v30
    %v34 = vld [vmem:[#allocation2] sm:$0xff]
    %v35 = vld [vmem:[%s24] sm:$0xff]
    %37 = vrot.lane.b32.xlu0 %v34, 16
    %v38 = vpop.permute.xlu0 %37
    %vm40 = vcmask 392448
    %41 = vst.msk [vmem:[#allocation5] sm:$0xff] %vm40, %v38
    %43 = vrot.lane.b32.xlu0 %v35, 32
    %v44 = vpop.permute.xlu0 %43
    %vm46 = vcmask 523648
    %47 = vst.msk [vmem:[#allocation5] sm:$0xff] %vm46, %v44
    %v48 = vld [vmem:[#allocation2] sm:$0xff]
    %v49 = vld [vmem:[%s24] sm:$0xff]
    %51 = vrot.lane.b32.xlu0 %v48, 32
    %v52 = vpop.permute.xlu0 %51
    %vm54 = vcmask 654848
    %55 = vst.msk [vmem:[#allocation5] sm:$0xff] %vm54, %v52
    %57 = vrot.lane.b32.xlu0 %v49, 48
    %v58 = vpop.permute.xlu0 %57
    %vm60 = vcmask 786048
    %61 = vst.msk [vmem:[#allocation5] sm:$0xff] %vm60, %v58
    %v62 = vld [vmem:[#allocation2] sm:$0xff]
    %v63 = vld [vmem:[%s24] sm:$0xff]
    %65 = vrot.lane.b32.xlu0 %v62, 48
    %v66 = vpop.permute.xlu0 %65
    %vm68 = vcmask 917248
    %69 = vst.msk [vmem:[#allocation5] sm:$0xff] %vm68, %v66
    %71 = vrot.lane.b32.xlu0 %v63, 64
    %v72 = vpop.permute.xlu0 %71
    %vm74 = vcmask 1048448
    %75 = vst.msk [vmem:[#allocation5] sm:$0xff] %vm74, %v72
    %v76 = vld [vmem:[#allocation2] sm:$0xff]
    %v77 = vld [vmem:[%s24] sm:$0xff]
    %79 = vrot.lane.b32.xlu0 %v76, 64
    %v80 = vpop.permute.xlu0 %79
    %82 = vst.msk [vmem:[#allocation5 + $0x8] sm:$0xff] %vm26, %v80
    %84 = vrot.lane.b32.xlu0 %v77, 80
    %v85 = vpop.permute.xlu0 %84
    %87 = vst.msk [vmem:[#allocation5 + $0x8] sm:$0xff] %vm32, %v85
    %v88 = vld [vmem:[#allocation2] sm:$0xff]
    %v89 = vld [vmem:[%s24] sm:$0xff]
    %91 = vrot.lane.b32.xlu0 %v88, 80
    %v92 = vpop.permute.xlu0 %91
    %94 = vst.msk [vmem:[#allocation5 + $0x8] sm:$0xff] %vm40, %v92
    %96 = vrot.lane.b32.xlu0 %v89, 96
    %v97 = vpop.permute.xlu0 %96
    %99 = vst.msk [vmem:[#allocation5 + $0x8] sm:$0xff] %vm46, %v97
    %v100 = vld [vmem:[#allocation2] sm:$0xff]
    %v101 = vld [vmem:[%s24] sm:$0xff]
    %103 = vrot.lane.b32.xlu0 %v100, 96
    %v104 = vpop.permute.xlu0 %103
    %106 = vst.msk [vmem:[#allocation5 + $0x8] sm:$0xff] %vm54, %v104
    %108 = vrot.lane.b32.xlu0 %v101, 112
    %v109 = vpop.permute.xlu0 %108
    %111 = vst.msk [vmem:[#allocation5 + $0x8] sm:$0xff] %vm60, %v109
    %v112 = vld [vmem:[#allocation2] sm:$0xff]
    %v113 = vld [vmem:[%s24] sm:$0xff]
    %115 = vrot.lane.b32.xlu0 %v112, 112
    %v116 = vpop.permute.xlu0 %115
    %118 = vst.msk [vmem:[#allocation5 + $0x8] sm:$0xff] %vm68, %v116
    %119 = vst.msk [vmem:[#allocation5 + $0x8] sm:$0xff] %vm74, %v113
    // Predicated region
    $region10: #{tpu_custom_call.1} parent=1 // pred_check
      _
    $region11: #{tpu_custom_call.1} parent=1 // pred_check_branch
      %121 = sbr.rel (0) target = $region13
    $region12: #{tpu_custom_call.1} parent=1 // pred_region
      %s123 = ssub.s32 256, 256
      %124 = vsyncadd [#allocation4], %s123
      %s126 = sshll.u32 [#allocation5], 4
      %s127 = int_to_ptr.vmem [resolvable:$true] %s126
      %129 = dma.vmem_to_hbm [thread:$0]  %s127, 256, %s1, [#allocation4]
    $region13: #{tpu_custom_call.1} parent=1 // pred_fallthru
      _
    // Predicated region
    $region14: #{tpu_custom_call.1} parent=1 // pred_check
      _
    $region15: #{tpu_custom_call.1} parent=1 // pred_check_branch
      %131 = sbr.rel (0) target = $region17
    $region16: #{tpu_custom_call.1} parent=1 // pred_region
      %132 = dma.done [#allocation4], 256
    $region17: #{tpu_custom_call.1} parent=1 // pred_fallthru
      _
    %133 = vsyncpa [#allocation3], 1
    %134 = vsyncpa [#allocation4], 1

</llo_original>
